<compile_context>
chip_gen: v7x
topology: tpu7x:2x2x1
jax: 0.10.0
libtpu: 0.0.40
codegen_flags: <defaults>
</compile_context>

<pallas_src>
import functools

import jax
import jax.numpy as jnp
from jax import lax
from jax.experimental import pallas as pl
from jax.experimental.pallas import tpu as pltpu


def convnext_kernel(x_ref, w_ref, gamma_ref, beta_ref, o_ref,
                    xvf_ref, lhs_ref, *, H, W, KH, KW, base, eps):
    # x_ref:     (N, Cin, H*W)        NCHW input, spatial flattened (lane-dense)
    # w_ref:     (Cout, KH*KW*Cin)    conv weight, rows tap-major / Cin-minor
    # gamma_ref: (Cout, 1)
    # beta_ref:  (Cout, 1)
    # o_ref:     (N, Cout, H*W)       flattened NCHW output
    # xvf_ref:   (N, Cin, L)          scratch: vertically zero-padded flat image
    # lhs_ref:   (KH*KW*Cin, N*H*W)   scratch: im2col matrix, lane-dense columns
    N, Cin, HW = x_ref.shape
    Cout, _ = w_ref.shape

    # ---- vertical zero padding into the flat scratch (zero, copy interior) ----
    xvf_ref[...] = jnp.zeros_like(xvf_ref)
    xvf_ref[:, :, base + W:base + W + HW] = x_ref[...]

    # ---- im2col build: each tap is a contiguous lane-slice of the padded-flat
    #      image; horizontal (left/right) padding is applied as a column mask.
    w_idx = lax.broadcasted_iota(jnp.int32, (Cin, HW), 1) % W
    not_left_edge = w_idx != 0           # w == 0   invalid when kj == 0
    not_right_edge = w_idx != W - 1      # w == W-1 invalid when kj == KW-1
    for ki in range(KH):
        for kj in range(KW):
            tap = ki * KW + kj
            start = base + ki * W + (kj - 1)
            for n in range(N):
                src = xvf_ref[n, :, start:start + HW]          # (Cin, HW)
                if kj == 0:
                    src = jnp.where(not_left_edge, src, 0.0)
                elif kj == KW - 1:
                    src = jnp.where(not_right_edge, src, 0.0)
                lhs_ref[tap * Cin:(tap + 1) * Cin, n * HW:(n + 1) * HW] = src

    # ---- Conv2d: ONE MXU matmul over the full K = KH*KW*Cin contraction ----
    y = jnp.dot(w_ref[...], lhs_ref[...],
                preferred_element_type=jnp.float32)            # (Cout, N*HW)

    # ---- BatchNorm2d (training-mode batch stats), one pass + folded affine ----
    inv_cnt = 1.0 / (N * HW)
    s = jnp.sum(y, axis=1, keepdims=True)                      # (Cout, 1)
    ss = jnp.sum(y * y, axis=1, keepdims=True)                 # (Cout, 1)
    mean = s * inv_cnt
    var = ss * inv_cnt - mean * mean                           # biased variance
    scale = gamma_ref[...] * lax.rsqrt(var + eps)
    shift = beta_ref[...] - mean * scale

    # ---- normalize + affine + ReLU in one pass ----
    out = jnp.maximum(y * scale + shift, 0.0)                  # (Cout, N*HW)

    # ---- lane-dense stores (256 lanes), already in flattened-NCHW order ----
    for n in range(N):
        o_ref[n] = out[:, n * HW:(n + 1) * HW]


@jax.jit
def convnext_conv(x_nchw, weight_oihw, gamma, beta):
    """ConvNextConv forward: conv3x3(s1,p1,no bias) -> BN(train stats) -> ReLU."""
    N, Cin, H, W = x_nchw.shape
    Cout, Cin_w, KH, KW = weight_oihw.shape
    assert Cin_w == Cin and KH == 3 and KW == 3  # module defaults: k=3, s=1, p=1
    HW = H * W
    base = W                                  # slack so the (kj-1) shift never underflows
    L = base + KH * W + HW                    # padded-flat scratch length

    x_flat = x_nchw.reshape(N, Cin, HW)       # free contiguous reshape (stays NCHW)
    # (Cout,Cin,KH,KW) -> (Cout, KH*KW*Cin), rows tap-major / Cin-minor (tiny weight prep).
    w2 = jnp.transpose(weight_oihw, (0, 2, 3, 1)).reshape(Cout, KH * KW * Cin)
    gamma2 = gamma.reshape(Cout, 1).astype(jnp.float32)
    beta2 = beta.reshape(Cout, 1).astype(jnp.float32)

    kernel = functools.partial(convnext_kernel, H=H, W=W, KH=KH, KW=KW,
                               base=base, eps=1e-5)

    # TODO(synk): for production-scale ConvNeXt shapes (e.g. N=32, H=W=56, C=96)
    # this single-grid-point design must be gridded over N/H tiles with BN
    # partial sums (sum/sumsq) accumulated across an "arbitrary" axis plus a
    # finalize pass; at the test shape everything (<0.2 MiB) fits in VMEM.
    out_flat = pl.pallas_call(
        kernel,
        out_shape=jax.ShapeDtypeStruct((N, Cout, HW), jnp.float32),
        in_specs=[pl.BlockSpec(memory_space=pltpu.MemorySpace.VMEM)] * 4,
        out_specs=pl.BlockSpec(memory_space=pltpu.MemorySpace.VMEM),
        scratch_shapes=[
            pltpu.VMEM((N, Cin, L), jnp.float32),              # padded-flat input
            pltpu.VMEM((KH * KW * Cin, N * HW), jnp.float32),  # im2col lhs
        ],
    )(x_flat, w2, gamma2, beta2)

    return out_flat.reshape(N, Cout, H, W)    # free contiguous reshape -> NCHW


def reference_forward(x_nchw, weight_oihw, gamma, beta, padding=1):
    """Pure-JAX reference of the PyTorch forward (training-mode BN)."""
    conv = jax.lax.conv_general_dilated(
        x_nchw, weight_oihw,
        window_strides=(1, 1),
        padding=((padding, padding), (padding, padding)),
        dimension_numbers=("NCHW", "OIHW", "NCHW"),
    )
    mean = jnp.mean(conv, axis=(0, 2, 3), keepdims=True)
    var = jnp.mean((conv - mean) ** 2, axis=(0, 2, 3), keepdims=True)
    out = (conv - mean) * jax.lax.rsqrt(var + 1e-5)
    out = out * gamma.reshape(1, -1, 1, 1) + beta.reshape(1, -1, 1, 1)
    return jnp.maximum(out, 0.0)


if __name__ == "__main__":
    # Small shapes consistent with the module: N=2, Cin=4, Cout=8, 16x16 spatial.
    N, Cin, Cout, H, W = 2, 4, 8, 16, 16
    KH = KW = 3

    key = jax.random.PRNGKey(0)
    kx, kw = jax.random.split(key)
    x = jax.random.normal(kx, (N, Cin, H, W), dtype=jnp.float32)

    # Deterministic parameter init (PyTorch-style scale for conv weight;
    # BatchNorm2d default init: gamma=1, beta=0).
    fan_in = Cin * KH * KW
    weight = jax.random.normal(kw, (Cout, Cin, KH, KW), dtype=jnp.float32) / jnp.sqrt(fan_in)
    gamma = jnp.ones((Cout,), dtype=jnp.float32)
    beta = jnp.zeros((Cout,), dtype=jnp.float32)

    out = convnext_conv(x, weight, gamma, beta)
    out = jax.block_until_ready(out)

    ref = reference_forward(x, weight, gamma, beta)
    assert out.shape == (N, Cout, H, W)
    assert jnp.allclose(out, ref, atol=2e-3, rtol=2e-3)

    print("KERNEL_OK")
</pallas_src>

<mosaic_0001>
module attributes {stable_mosaic.version = 11 : i64} {
  func.func @convnext_kernel(%arg0: memref<2x4x256xf32, #tpu.memory_space<vmem>>, %arg1: memref<8x36xf32, #tpu.memory_space<vmem>>, %arg2: memref<8x1xf32, #tpu.memory_space<vmem>>, %arg3: memref<8x1xf32, #tpu.memory_space<vmem>>, %arg4: memref<2x8x256xf32, #tpu.memory_space<vmem>>, %arg5: memref<2x4x320xf32, #tpu.memory_space<vmem>>, %arg6: memref<36x512xf32, #tpu.memory_space<vmem>>) attributes {dimension_semantics = [], scalar_prefetch = 0 : i64, scratch_operands = 2 : i64, tpu.core_type = #tpu.core_type<tc>} {
    %cst = arith.constant 0.000000e+00 : f32
    %0 = vector.broadcast %cst : f32 to vector<2x4x320xf32>
    %c0 = arith.constant 0 : index
    %c0_0 = arith.constant 0 : index
    %c0_1 = arith.constant 0 : index
    %1 = vector.load %arg5[%c0, %c0_0, %c0_1] : memref<2x4x320xf32, #tpu.memory_space<vmem>>, vector<2x4x320xf32>
    tpu.vector_store %arg5[%c0, %c0_0, %c0_1], %0 {strides = array<i32>} : memref<2x4x320xf32, #tpu.memory_space<vmem>>, vector<2x4x320xf32>,
    %c0_2 = arith.constant 0 : index
    %c0_3 = arith.constant 0 : index
    %c0_4 = arith.constant 0 : index
    %2 = vector.load %arg0[%c0_2, %c0_3, %c0_4] : memref<2x4x256xf32, #tpu.memory_space<vmem>>, vector<2x4x256xf32>
    %c0_5 = arith.constant 0 : index
    %c0_6 = arith.constant 0 : index
    %c32 = arith.constant 32 : index
    %3 = vector.load %arg5[%c0_5, %c0_6, %c32] : memref<2x4x320xf32, #tpu.memory_space<vmem>>, vector<2x4x256xf32>
    tpu.vector_store %arg5[%c0_5, %c0_6, %c32], %2 {strides = array<i32>} : memref<2x4x320xf32, #tpu.memory_space<vmem>>, vector<2x4x256xf32>,
    %4 = tpu.iota {dimensions = array<i32: 1>} : vector<4x256xi32>
    %c16_i32 = arith.constant 16 : i32
    %c0_i32 = arith.constant 0 : i32
    %5 = arith.cmpi eq, %c16_i32, %c0_i32 : i32
    %c1_i32 = arith.constant 1 : i32
    %6 = arith.select %5, %c1_i32, %c16_i32 : i32
    %7 = vector.broadcast %6 : i32 to vector<4x256xi32>
    %8 = arith.remsi %4, %7 : vector<4x256xi32>
    %c0_i32_7 = arith.constant 0 : i32
    %9 = vector.broadcast %c0_i32_7 : i32 to vector<4x256xi32>
    %10 = arith.cmpi ne, %8, %9 : vector<4x256xi32>
    %c0_i32_8 = arith.constant 0 : i32
    %11 = vector.broadcast %c0_i32_8 : i32 to vector<4x256xi32>
    %12 = arith.cmpi slt, %8, %11 : vector<4x256xi32>
    %c0_i32_9 = arith.constant 0 : i32
    %13 = arith.cmpi slt, %6, %c0_i32_9 : i32
    %14 = vector.broadcast %13 : i1 to vector<4x256xi1>
    %15 = vector.broadcast %14 : vector<4x256xi1> to vector<4x256xi1>
    %16 = arith.xori %12, %15 : vector<4x256xi1>
    %17 = arith.andi %16, %10 : vector<4x256xi1>
    %18 = vector.broadcast %6 : i32 to vector<4x256xi32>
    %19 = arith.addi %8, %18 : vector<4x256xi32>
    %20 = arith.select %17, %19, %8 : vector<4x256xi1>, vector<4x256xi32>
    %c0_i32_10 = arith.constant 0 : i32
    %21 = vector.broadcast %c0_i32_10 : i32 to vector<4x256xi32>
    %22 = arith.cmpi ne, %20, %21 : vector<4x256xi32>
    %c15_i32 = arith.constant 15 : i32
    %23 = vector.broadcast %c15_i32 : i32 to vector<4x256xi32>
    %24 = arith.cmpi ne, %20, %23 : vector<4x256xi32>
    %c0_11 = arith.constant 0 : index
    %c0_12 = arith.constant 0 : index
    %c15 = arith.constant 15 : index
    %25 = vector.load %arg5[%c0_11, %c0_12, %c15] : memref<2x4x320xf32, #tpu.memory_space<vmem>>, vector<1x4x256xf32>
    %26 = vector.shape_cast %25 : vector<1x4x256xf32> to vector<4x256xf32>
    %cst_13 = arith.constant 0.000000e+00 : f32
    %27 = vector.broadcast %cst_13 : f32 to vector<4x256xf32>
    %28 = arith.select %22, %26, %27 : vector<4x256xi1>, vector<4x256xf32>
    %c0_14 = arith.constant 0 : index
    %c0_15 = arith.constant 0 : index
    %29 = vector.load %arg6[%c0_14, %c0_15] : memref<36x512xf32, #tpu.memory_space<vmem>>, vector<4x256xf32>
    tpu.vector_store %arg6[%c0_14, %c0_15], %28 {strides = array<i32>} : memref<36x512xf32, #tpu.memory_space<vmem>>, vector<4x256xf32>,
    %c1 = arith.constant 1 : index
    %c0_16 = arith.constant 0 : index
    %c15_17 = arith.constant 15 : index
    %30 = vector.load %arg5[%c1, %c0_16, %c15_17] : memref<2x4x320xf32, #tpu.memory_space<vmem>>, vector<1x4x256xf32>
    %31 = vector.shape_cast %30 : vector<1x4x256xf32> to vector<4x256xf32>
    %cst_18 = arith.constant 0.000000e+00 : f32
    %32 = vector.broadcast %cst_18 : f32 to vector<4x256xf32>
    %33 = arith.select %22, %31, %32 : vector<4x256xi1>, vector<4x256xf32>
    %c0_19 = arith.constant 0 : index
    %c256 = arith.constant 256 : index
    %34 = vector.load %arg6[%c0_19, %c256] : memref<36x512xf32, #tpu.memory_space<vmem>>, vector<4x256xf32>
    tpu.vector_store %arg6[%c0_19, %c256], %33 {strides = array<i32>} : memref<36x512xf32, #tpu.memory_space<vmem>>, vector<4x256xf32>,
    %c0_20 = arith.constant 0 : index
    %c0_21 = arith.constant 0 : index
    %c16 = arith.constant 16 : index
    %35 = vector.load %arg5[%c0_20, %c0_21, %c16] : memref<2x4x320xf32, #tpu.memory_space<vmem>>, vector<1x4x256xf32>
    %36 = vector.shape_cast %35 : vector<1x4x256xf32> to vector<4x256xf32>
    %c4 = arith.constant 4 : index
    %c0_22 = arith.constant 0 : index
    %37 = vector.load %arg6[%c4, %c0_22] : memref<36x512xf32, #tpu.memory_space<vmem>>, vector<4x256xf32>
    tpu.vector_store %arg6[%c4, %c0_22], %36 {strides = array<i32>} : memref<36x512xf32, #tpu.memory_space<vmem>>, vector<4x256xf32>,
    %c1_23 = arith.constant 1 : index
    %c0_24 = arith.constant 0 : index
    %c16_25 = arith.constant 16 : index
    %38 = vector.load %arg5[%c1_23, %c0_24, %c16_25] : memref<2x4x320xf32, #tpu.memory_space<vmem>>, vector<1x4x256xf32>
    %39 = vector.shape_cast %38 : vector<1x4x256xf32> to vector<4x256xf32>
    %c4_26 = arith.constant 4 : index
    %c256_27 = arith.constant 256 : index
    %40 = vector.load %arg6[%c4_26, %c256_27] : memref<36x512xf32, #tpu.memory_space<vmem>>, vector<4x256xf32>
    tpu.vector_store %arg6[%c4_26, %c256_27], %39 {strides = array<i32>} : memref<36x512xf32, #tpu.memory_space<vmem>>, vector<4x256xf32>,
    %c0_28 = arith.constant 0 : index
    %c0_29 = arith.constant 0 : index
    %c17 = arith.constant 17 : index
    %41 = vector.load %arg5[%c0_28, %c0_29, %c17] : memref<2x4x320xf32, #tpu.memory_space<vmem>>, vector<1x4x256xf32>
    %42 = vector.shape_cast %41 : vector<1x4x256xf32> to vector<4x256xf32>
    %cst_30 = arith.constant 0.000000e+00 : f32
    %43 = vector.broadcast %cst_30 : f32 to vector<4x256xf32>
    %44 = arith.select %24, %42, %43 : vector<4x256xi1>, vector<4x256xf32>
    %c8 = arith.constant 8 : index
    %c0_31 = arith.constant 0 : index
    %45 = vector.load %arg6[%c8, %c0_31] : memref<36x512xf32, #tpu.memory_space<vmem>>, vector<4x256xf32>
    tpu.vector_store %arg6[%c8, %c0_31], %44 {strides = array<i32>} : memref<36x512xf32, #tpu.memory_space<vmem>>, vector<4x256xf32>,
    %c1_32 = arith.constant 1 : index
    %c0_33 = arith.constant 0 : index
    %c17_34 = arith.constant 17 : index
    %46 = vector.load %arg5[%c1_32, %c0_33, %c17_34] : memref<2x4x320xf32, #tpu.memory_space<vmem>>, vector<1x4x256xf32>
    %47 = vector.shape_cast %46 : vector<1x4x256xf32> to vector<4x256xf32>
    %cst_35 = arith.constant 0.000000e+00 : f32
    %48 = vector.broadcast %cst_35 : f32 to vector<4x256xf32>
    %49 = arith.select %24, %47, %48 : vector<4x256xi1>, vector<4x256xf32>
    %c8_36 = arith.constant 8 : index
    %c256_37 = arith.constant 256 : index
    %50 = vector.load %arg6[%c8_36, %c256_37] : memref<36x512xf32, #tpu.memory_space<vmem>>, vector<4x256xf32>
    tpu.vector_store %arg6[%c8_36, %c256_37], %49 {strides = array<i32>} : memref<36x512xf32, #tpu.memory_space<vmem>>, vector<4x256xf32>,
    %c0_38 = arith.constant 0 : index
    %c0_39 = arith.constant 0 : index
    %c31 = arith.constant 31 : index
    %51 = vector.load %arg5[%c0_38, %c0_39, %c31] : memref<2x4x320xf32, #tpu.memory_space<vmem>>, vector<1x4x256xf32>
    %52 = vector.shape_cast %51 : vector<1x4x256xf32> to vector<4x256xf32>
    %cst_40 = arith.constant 0.000000e+00 : f32
    %53 = vector.broadcast %cst_40 : f32 to vector<4x256xf32>
    %54 = arith.select %22, %52, %53 : vector<4x256xi1>, vector<4x256xf32>
    %c12 = arith.constant 12 : index
    %c0_41 = arith.constant 0 : index
    %55 = vector.load %arg6[%c12, %c0_41] : memref<36x512xf32, #tpu.memory_space<vmem>>, vector<4x256xf32>
    tpu.vector_store %arg6[%c12, %c0_41], %54 {strides = array<i32>} : memref<36x512xf32, #tpu.memory_space<vmem>>, vector<4x256xf32>,
    %c1_42 = arith.constant 1 : index
    %c0_43 = arith.constant 0 : index
    %c31_44 = arith.constant 31 : index
    %56 = vector.load %arg5[%c1_42, %c0_43, %c31_44] : memref<2x4x320xf32, #tpu.memory_space<vmem>>, vector<1x4x256xf32>
    %57 = vector.shape_cast %56 : vector<1x4x256xf32> to vector<4x256xf32>
    %cst_45 = arith.constant 0.000000e+00 : f32
    %58 = vector.broadcast %cst_45 : f32 to vector<4x256xf32>
    %59 = arith.select %22, %57, %58 : vector<4x256xi1>, vector<4x256xf32>
    %c12_46 = arith.constant 12 : index
    %c256_47 = arith.constant 256 : index
    %60 = vector.load %arg6[%c12_46, %c256_47] : memref<36x512xf32, #tpu.memory_space<vmem>>, vector<4x256xf32>
    tpu.vector_store %arg6[%c12_46, %c256_47], %59 {strides = array<i32>} : memref<36x512xf32, #tpu.memory_space<vmem>>, vector<4x256xf32>,
    %c0_48 = arith.constant 0 : index
    %c0_49 = arith.constant 0 : index
    %c32_50 = arith.constant 32 : index
    %61 = vector.load %arg5[%c0_48, %c0_49, %c32_50] : memref<2x4x320xf32, #tpu.memory_space<vmem>>, vector<1x4x256xf32>
    %62 = vector.shape_cast %61 : vector<1x4x256xf32> to vector<4x256xf32>
    %c16_51 = arith.constant 16 : index
    %c0_52 = arith.constant 0 : index
    %63 = vector.load %arg6[%c16_51, %c0_52] : memref<36x512xf32, #tpu.memory_space<vmem>>, vector<4x256xf32>
    tpu.vector_store %arg6[%c16_51, %c0_52], %62 {strides = array<i32>} : memref<36x512xf32, #tpu.memory_space<vmem>>, vector<4x256xf32>,
    %c1_53 = arith.constant 1 : index
    %c0_54 = arith.constant 0 : index
    %c32_55 = arith.constant 32 : index
    %64 = vector.load %arg5[%c1_53, %c0_54, %c32_55] : memref<2x4x320xf32, #tpu.memory_space<vmem>>, vector<1x4x256xf32>
    %65 = vector.shape_cast %64 : vector<1x4x256xf32> to vector<4x256xf32>
    %c16_56 = arith.constant 16 : index
    %c256_57 = arith.constant 256 : index
    %66 = vector.load %arg6[%c16_56, %c256_57] : memref<36x512xf32, #tpu.memory_space<vmem>>, vector<4x256xf32>
    tpu.vector_store %arg6[%c16_56, %c256_57], %65 {strides = array<i32>} : memref<36x512xf32, #tpu.memory_space<vmem>>, vector<4x256xf32>,
    %c0_58 = arith.constant 0 : index
    %c0_59 = arith.constant 0 : index
    %c33 = arith.constant 33 : index
    %67 = vector.load %arg5[%c0_58, %c0_59, %c33] : memref<2x4x320xf32, #tpu.memory_space<vmem>>, vector<1x4x256xf32>
    %68 = vector.shape_cast %67 : vector<1x4x256xf32> to vector<4x256xf32>
    %cst_60 = arith.constant 0.000000e+00 : f32
    %69 = vector.broadcast %cst_60 : f32 to vector<4x256xf32>
    %70 = arith.select %24, %68, %69 : vector<4x256xi1>, vector<4x256xf32>
    %c20 = arith.constant 20 : index
    %c0_61 = arith.constant 0 : index
    %71 = vector.load %arg6[%c20, %c0_61] : memref<36x512xf32, #tpu.memory_space<vmem>>, vector<4x256xf32>
    tpu.vector_store %arg6[%c20, %c0_61], %70 {strides = array<i32>} : memref<36x512xf32, #tpu.memory_space<vmem>>, vector<4x256xf32>,
    %c1_62 = arith.constant 1 : index
    %c0_63 = arith.constant 0 : index
    %c33_64 = arith.constant 33 : index
    %72 = vector.load %arg5[%c1_62, %c0_63, %c33_64] : memref<2x4x320xf32, #tpu.memory_space<vmem>>, vector<1x4x256xf32>
    %73 = vector.shape_cast %72 : vector<1x4x256xf32> to vector<4x256xf32>
    %cst_65 = arith.constant 0.000000e+00 : f32
    %74 = vector.broadcast %cst_65 : f32 to vector<4x256xf32>
    %75 = arith.select %24, %73, %74 : vector<4x256xi1>, vector<4x256xf32>
    %c20_66 = arith.constant 20 : index
    %c256_67 = arith.constant 256 : index
    %76 = vector.load %arg6[%c20_66, %c256_67] : memref<36x512xf32, #tpu.memory_space<vmem>>, vector<4x256xf32>
    tpu.vector_store %arg6[%c20_66, %c256_67], %75 {strides = array<i32>} : memref<36x512xf32, #tpu.memory_space<vmem>>, vector<4x256xf32>,
    %c0_68 = arith.constant 0 : index
    %c0_69 = arith.constant 0 : index
    %c47 = arith.constant 47 : index
    %77 = vector.load %arg5[%c0_68, %c0_69, %c47] : memref<2x4x320xf32, #tpu.memory_space<vmem>>, vector<1x4x256xf32>
    %78 = vector.shape_cast %77 : vector<1x4x256xf32> to vector<4x256xf32>
    %cst_70 = arith.constant 0.000000e+00 : f32
    %79 = vector.broadcast %cst_70 : f32 to vector<4x256xf32>
    %80 = arith.select %22, %78, %79 : vector<4x256xi1>, vector<4x256xf32>
    %c24 = arith.constant 24 : index
    %c0_71 = arith.constant 0 : index
    %81 = vector.load %arg6[%c24, %c0_71] : memref<36x512xf32, #tpu.memory_space<vmem>>, vector<4x256xf32>
    tpu.vector_store %arg6[%c24, %c0_71], %80 {strides = array<i32>} : memref<36x512xf32, #tpu.memory_space<vmem>>, vector<4x256xf32>,
    %c1_72 = arith.constant 1 : index
    %c0_73 = arith.constant 0 : index
    %c47_74 = arith.constant 47 : index
    %82 = vector.load %arg5[%c1_72, %c0_73, %c47_74] : memref<2x4x320xf32, #tpu.memory_space<vmem>>, vector<1x4x256xf32>
    %83 = vector.shape_cast %82 : vector<1x4x256xf32> to vector<4x256xf32>
    %cst_75 = arith.constant 0.000000e+00 : f32
    %84 = vector.broadcast %cst_75 : f32 to vector<4x256xf32>
    %85 = arith.select %22, %83, %84 : vector<4x256xi1>, vector<4x256xf32>
    %c24_76 = arith.constant 24 : index
    %c256_77 = arith.constant 256 : index
    %86 = vector.load %arg6[%c24_76, %c256_77] : memref<36x512xf32, #tpu.memory_space<vmem>>, vector<4x256xf32>
    tpu.vector_store %arg6[%c24_76, %c256_77], %85 {strides = array<i32>} : memref<36x512xf32, #tpu.memory_space<vmem>>, vector<4x256xf32>,
    %c0_78 = arith.constant 0 : index
    %c0_79 = arith.constant 0 : index
    %c48 = arith.constant 48 : index
    %87 = vector.load %arg5[%c0_78, %c0_79, %c48] : memref<2x4x320xf32, #tpu.memory_space<vmem>>, vector<1x4x256xf32>
    %88 = vector.shape_cast %87 : vector<1x4x256xf32> to vector<4x256xf32>
    %c28 = arith.constant 28 : index
    %c0_80 = arith.constant 0 : index
    %89 = vector.load %arg6[%c28, %c0_80] : memref<36x512xf32, #tpu.memory_space<vmem>>, vector<4x256xf32>
    tpu.vector_store %arg6[%c28, %c0_80], %88 {strides = array<i32>} : memref<36x512xf32, #tpu.memory_space<vmem>>, vector<4x256xf32>,
    %c1_81 = arith.constant 1 : index
    %c0_82 = arith.constant 0 : index
    %c48_83 = arith.constant 48 : index
    %90 = vector.load %arg5[%c1_81, %c0_82, %c48_83] : memref<2x4x320xf32, #tpu.memory_space<vmem>>, vector<1x4x256xf32>
    %91 = vector.shape_cast %90 : vector<1x4x256xf32> to vector<4x256xf32>
    %c28_84 = arith.constant 28 : index
    %c256_85 = arith.constant 256 : index
    %92 = vector.load %arg6[%c28_84, %c256_85] : memref<36x512xf32, #tpu.memory_space<vmem>>, vector<4x256xf32>
    tpu.vector_store %arg6[%c28_84, %c256_85], %91 {strides = array<i32>} : memref<36x512xf32, #tpu.memory_space<vmem>>, vector<4x256xf32>,
    %c0_86 = arith.constant 0 : index
    %c0_87 = arith.constant 0 : index
    %c49 = arith.constant 49 : index
    %93 = vector.load %arg5[%c0_86, %c0_87, %c49] : memref<2x4x320xf32, #tpu.memory_space<vmem>>, vector<1x4x256xf32>
    %94 = vector.shape_cast %93 : vector<1x4x256xf32> to vector<4x256xf32>
    %cst_88 = arith.constant 0.000000e+00 : f32
    %95 = vector.broadcast %cst_88 : f32 to vector<4x256xf32>
    %96 = arith.select %24, %94, %95 : vector<4x256xi1>, vector<4x256xf32>
    %c32_89 = arith.constant 32 : index
    %c0_90 = arith.constant 0 : index
    %97 = vector.load %arg6[%c32_89, %c0_90] : memref<36x512xf32, #tpu.memory_space<vmem>>, vector<4x256xf32>
    tpu.vector_store %arg6[%c32_89, %c0_90], %96 {strides = array<i32>} : memref<36x512xf32, #tpu.memory_space<vmem>>, vector<4x256xf32>,
    %c1_91 = arith.constant 1 : index
    %c0_92 = arith.constant 0 : index
    %c49_93 = arith.constant 49 : index
    %98 = vector.load %arg5[%c1_91, %c0_92, %c49_93] : memref<2x4x320xf32, #tpu.memory_space<vmem>>, vector<1x4x256xf32>
    %99 = vector.shape_cast %98 : vector<1x4x256xf32> to vector<4x256xf32>
    %cst_94 = arith.constant 0.000000e+00 : f32
    %100 = vector.broadcast %cst_94 : f32 to vector<4x256xf32>
    %101 = arith.select %24, %99, %100 : vector<4x256xi1>, vector<4x256xf32>
    %c32_95 = arith.constant 32 : index
    %c256_96 = arith.constant 256 : index
    %102 = vector.load %arg6[%c32_95, %c256_96] : memref<36x512xf32, #tpu.memory_space<vmem>>, vector<4x256xf32>
    tpu.vector_store %arg6[%c32_95, %c256_96], %101 {strides = array<i32>} : memref<36x512xf32, #tpu.memory_space<vmem>>, vector<4x256xf32>,
    %c0_97 = arith.constant 0 : index
    %c0_98 = arith.constant 0 : index
    %103 = vector.load %arg1[%c0_97, %c0_98] : memref<8x36xf32, #tpu.memory_space<vmem>>, vector<8x36xf32>
    %c0_99 = arith.constant 0 : index
    %c0_100 = arith.constant 0 : index
    %104 = vector.load %arg6[%c0_99, %c0_100] : memref<36x512xf32, #tpu.memory_space<vmem>>, vector<36x512xf32>
    %cst_101 = arith.constant dense<0.000000e+00> : vector<8x512xf32>
    %105 = tpu.matmul %103, %104, %cst_101 {dimension_numbers = #tpu.dot_dimension_numbers<[1], [0], [0], [1], [0, 0, 1, 1], [], []>} : vector<8x36xf32>, vector<36x512xf32>, vector<8x512xf32> -> vector<8x512xf32>
    %cst_102 = arith.constant dense<0.000000e+00> : vector<8xf32>
    %106 = vector.multi_reduction <add>, %105, %cst_102 [1] : vector<8x512xf32> to vector<8xf32>
    %107 = vector.shape_cast %106 : vector<8xf32> to vector<8x1xf32>
    %108 = arith.mulf %105, %105 : vector<8x512xf32>
    %cst_103 = arith.constant dense<0.000000e+00> : vector<8xf32>
    %109 = vector.multi_reduction <add>, %108, %cst_103 [1] : vector<8x512xf32> to vector<8xf32>
    %110 = vector.shape_cast %109 : vector<8xf32> to vector<8x1xf32>
    %cst_104 = arith.constant 0.001953125 : f32
    %111 = vector.broadcast %cst_104 : f32 to vector<8x1xf32>
    %112 = arith.mulf %107, %111 : vector<8x1xf32>
    %cst_105 = arith.constant 0.001953125 : f32
    %113 = vector.broadcast %cst_105 : f32 to vector<8x1xf32>
    %114 = arith.mulf %110, %113 : vector<8x1xf32>
    %115 = arith.mulf %112, %112 : vector<8x1xf32>
    %116 = arith.subf %114, %115 : vector<8x1xf32>
    %c0_106 = arith.constant 0 : index
    %c0_107 = arith.constant 0 : index
    %117 = vector.load %arg2[%c0_106, %c0_107] : memref<8x1xf32, #tpu.memory_space<vmem>>, vector<8x1xf32>
    %cst_108 = arith.constant 9.99999974E-6 : f32
    %118 = vector.broadcast %cst_108 : f32 to vector<8x1xf32>
    %119 = arith.addf %116, %118 : vector<8x1xf32>
    %120 = math.rsqrt %119 : vector<8x1xf32>
    %121 = arith.mulf %117, %120 : vector<8x1xf32>
    %c0_109 = arith.constant 0 : index
    %c0_110 = arith.constant 0 : index
    %122 = vector.load %arg3[%c0_109, %c0_110] : memref<8x1xf32, #tpu.memory_space<vmem>>, vector<8x1xf32>
    %123 = arith.mulf %112, %121 : vector<8x1xf32>
    %124 = arith.subf %122, %123 : vector<8x1xf32>
    %125 = vector.broadcast %121 : vector<8x1xf32> to vector<8x512xf32>
    %126 = arith.mulf %105, %125 : vector<8x512xf32>
    %127 = vector.broadcast %124 : vector<8x1xf32> to vector<8x512xf32>
    %128 = arith.addf %126, %127 : vector<8x512xf32>
    %cst_111 = arith.constant 0.000000e+00 : f32
    %129 = vector.broadcast %cst_111 : f32 to vector<8x512xf32>
    %130 = arith.maximumf %128, %129 : vector<8x512xf32>
    %131 = vector.extract_strided_slice %130 {offsets = [0, 0], sizes = [8, 256], strides = [1, 1]} : vector<8x512xf32> to vector<8x256xf32>
    %c0_112 = arith.constant 0 : index
    %c0_113 = arith.constant 0 : index
    %c0_114 = arith.constant 0 : index
    %132 = vector.load %arg4[%c0_112, %c0_113, %c0_114] : memref<2x8x256xf32, #tpu.memory_space<vmem>>, vector<1x8x256xf32>
    %133 = vector.shape_cast %132 : vector<1x8x256xf32> to vector<8x256xf32>
    %134 = vector.shape_cast %131 : vector<8x256xf32> to vector<1x8x256xf32>
    tpu.vector_store %arg4[%c0_112, %c0_113, %c0_114], %134 {strides = array<i32>} : memref<2x8x256xf32, #tpu.memory_space<vmem>>, vector<1x8x256xf32>,
    %135 = vector.extract_strided_slice %130 {offsets = [0, 256], sizes = [8, 256], strides = [1, 1]} : vector<8x512xf32> to vector<8x256xf32>
    %c1_115 = arith.constant 1 : index
    %c0_116 = arith.constant 0 : index
    %c0_117 = arith.constant 0 : index
    %136 = vector.load %arg4[%c1_115, %c0_116, %c0_117] : memref<2x8x256xf32, #tpu.memory_space<vmem>>, vector<1x8x256xf32>
    %137 = vector.shape_cast %136 : vector<1x8x256xf32> to vector<8x256xf32>
    %138 = vector.shape_cast %135 : vector<8x256xf32> to vector<1x8x256xf32>
    tpu.vector_store %arg4[%c1_115, %c0_116, %c0_117], %138 {strides = array<i32>} : memref<2x8x256xf32, #tpu.memory_space<vmem>>, vector<1x8x256xf32>,
    return
  }
}

</mosaic_0001>

<llo_original>
// kernel: convnext_conv.1
$region0: #{convnext_conv.1}
  #allocation0 [shape = 'u32[]', space=smem, size = 0x4, offset = 0x4, fixed_abs, tag = 'smem constant byte address 0x4 - core index']
  #allocation1 [shape = 'u32[144,128]{1,0:T(1,128)}', space=vmem, size = 0x12000, scoped, tag = 'internal scratch']
  #allocation2 [shape = 'f32[2,4,320]{2,1,0:T(4,128)}', space=vmem, size = 0x3000, scoped, tag = 'scratch operand']
  #allocation3 [shape = 'f32[36,512]{1,0:T(8,128)}', space=vmem, size = 0x14000, scoped, tag = 'scratch operand']
  %s0 = inlined_call_operand.vmem [shape: f32[2,4,256], index: 0, kind: input, shape index: {}]
  %s1 = inlined_call_operand.vmem [shape: f32[8,36], index: 1, kind: input, shape index: {}]
  %s2 = inlined_call_operand.vmem [shape: f32[8,1], index: 2, kind: input, shape index: {}]
  %s3 = inlined_call_operand.vmem [shape: f32[8,1], index: 3, kind: input, shape index: {}]
  %s4 = inlined_call_operand.vmem [shape: f32[2,8,256], index: 4, kind: output, shape index: {}]
  %s5 = sld [smem:[#allocation0]]
  $region26: #{convnext_conv.1} parent=0
    _
  %s7 = ssub.s32 1, %s5
  %s8 = scalar_select 0, %s7, %s5
  // Predicated region
  $region2: #{convnext_conv.1} parent=0 // pred_check
    _
  $region3: #{convnext_conv.1} parent=0 // pred_check_branch
    %10 = sbr.rel (0) target = $region5
  $region4: #{convnext_conv.1} parent=0 // pred_region
    _
  $region5: #{convnext_conv.1} parent=0 // pred_fallthru
    _
  // Predicated region
  $region6: #{convnext_conv.1} parent=0 // pred_check
    _
  $region7: #{convnext_conv.1} parent=0 // pred_check_branch
    %12 = sbr.rel (0) target = $region9
  $region8: #{convnext_conv.1} parent=0 // pred_region
    _
  $region9: #{convnext_conv.1} parent=0 // pred_fallthru
    _
  // Predicated region
  $region10: #{convnext_conv.1} parent=0 // pred_check
    _
  $region11: #{convnext_conv.1} parent=0 // pred_check_branch
    %14 = sbr.rel (0) target = $region13
  $region12: #{convnext_conv.1} parent=0 // pred_region
    _
  $region13: #{convnext_conv.1} parent=0 // pred_fallthru
    _
  // Predicated region
  $region14: #{convnext_conv.1} parent=0 // pred_check
    _
  $region15: #{convnext_conv.1} parent=0 // pred_check_branch
    %16 = sbr.rel (0) target = $region17
  $region16: #{convnext_conv.1} parent=0 // pred_region
    _
  $region17: #{convnext_conv.1} parent=0 // pred_fallthru
    _
  %17 = vst [vmem:[#allocation2] sm:$0xff] 0.0
  %vm18 = vcmask 519168
  %19 = vst.msk [vmem:[#allocation2 + $0x8] sm:$0xf] %vm18, 0.0
  %20 = vst [vmem:[#allocation2 + $0xc] sm:$0xff] 0.0
  %21 = vst.msk [vmem:[#allocation2 + $0x14] sm:$0xf] %vm18, 0.0
  %v22 = vld [vmem:[%s0] sm:$0xff]
  %v23 = vld [vmem:[%s0 + $0x8] sm:$0xff]
  %26 = vrot.lane.b32.xlu0 %v22, 32
  %v27 = vpop.permute.xlu0 %26
  %28 = vrot.lane.b32.xlu0 %v23, 32
  %v29 = vpop.permute.xlu0 %28
  %v30 = vrot.slane %v27, 4
  %v31 = vrot.slane %v29, 4
  %vm32 = vcmask 261120
  %v33 = vsel %vm32, %v30, %v27
  %v34 = vsel %vm32, %v31, %v29
  %vm39 = vcmask 1043712
  %vm40 = vcmask 1047556
  %vm41 = vmor %vm40, %vm39
  %42 = vst.msk [vmem:[#allocation2] sm:$0xff] %vm41, %v33
  %vm43 = vcmask 257024
  %44 = vst.msk [vmem:[#allocation2 + $0x8] sm:$0xf] %vm43, %v30
  %45 = vst.msk [vmem:[#allocation2 + $0xc] sm:$0xff] %vm41, %v34
  %46 = vst.msk [vmem:[#allocation2 + $0x14] sm:$0xf] %vm43, %v31
  %v47 = vlaneseq
  %v48 = vand.u32 %v47, 127
  %v49 = vadd.s32 %v48, 128
  %vm50 = vcmp.lt.s32.totalorder %v48, 0
  %v51 = vsub.s32 0, %v48
  %v52 = vsel %vm50, %v51, %v48
  %v53 = vshrl.u32 %v52, 4
  %v54 = vand.u32 %v52, 15
  %v55 = vsub.s32 0, %v54
  %v56 = vsel %vm50, %v55, %v54
  %vm57 = vcmp.lt.s32.totalorder %v49, 0
  %v58 = vsub.s32 0, %v49
  %v59 = vsel %vm57, %v58, %v49
  %v60 = vshrl.u32 %v59, 4
  %v61 = vand.u32 %v59, 15
  %v62 = vsub.s32 0, %v61
  %v63 = vsel %vm57, %v62, %v61
  %vm64 = vcmp.ne.s32.totalorder %v56, 0
  %vm65 = vcmp.ne.s32.totalorder %v63, 0
  %vm66 = vcmp.lt.s32.totalorder %v56, 0
  %vm67 = vcmp.lt.s32.totalorder %v63, 0
  %vm68 = vmand %vm66, %vm64
  %vm69 = vmand %vm67, %vm65
  %v70 = vadd.s32 %v56, 16
  %v71 = vadd.s32 %v63, 16
  %v72 = vsel %vm68, %v70, %v56
  %v73 = vsel %vm69, %v71, %v63
  %vm74 = vcmp.ne.s32.totalorder %v72, 0
  %vm75 = vcmp.ne.s32.totalorder %v73, 0
  %vm76 = vcmp.ne.s32.totalorder %v72, 15
  %vm77 = vcmp.ne.s32.totalorder %v73, 15
  %v78 = vld [vmem:[#allocation2] sm:$0xff]
  %v79 = vld [vmem:[#allocation2 + $0x8] sm:$0xf]
  %v82 = vcombine.high %v78, %v78
  %83 = vrot.lane.b32.xlu0 %v78, 113
  %v84 = vpop.permute.xlu0 %83
  %85 = vrot.lane.b32.xlu0 %v82, 113
  %v86 = vpop.permute.xlu0 %85
  %87 = vrot.lane.b32.xlu0 %v79, 113
  %v88 = vpop.permute.xlu0 %87
  %vm89 = vcmask 924672
  %v90 = vsel %vm89, %v84, %v86
  %v91 = vsel %vm89, %v86, %v88
  %v94 = vsel %vm74, %v90, 0.0
  %v95 = vsel %vm75, %v91, 0.0
  %96 = vst [vmem:[#allocation3] sm:$0xf] %v94
  %97 = vst [vmem:[#allocation3 + $0x8] sm:$0xf] %v95
  %s98 = scalar_lea.vmem [#allocation2], 12
  %v99 = vld [vmem:[%s98] sm:$0xff]
  %v100 = vld [vmem:[%s98 + $0x8] sm:$0xf]
  %v103 = vcombine.high %v99, %v99
  %104 = vrot.lane.b32.xlu0 %v99, 113
  %v105 = vpop.permute.xlu0 %104
  %106 = vrot.lane.b32.xlu0 %v103, 113
  %v107 = vpop.permute.xlu0 %106
  %108 = vrot.lane.b32.xlu0 %v100, 113
  %v109 = vpop.permute.xlu0 %108
  %v110 = vsel %vm89, %v105, %v107
  %v111 = vsel %vm89, %v107, %v109
  %v114 = vsel %vm74, %v110, 0.0
  %v115 = vsel %vm75, %v111, 0.0
  %116 = vst [vmem:[#allocation3 + $0x10] sm:$0xf] %v114
  %117 = vst [vmem:[#allocation3 + $0x18] sm:$0xf] %v115
  %v118 = vld [vmem:[#allocation2] sm:$0xff]
  %v119 = vld [vmem:[#allocation2 + $0x8] sm:$0xf]
  %v122 = vcombine.low %v118, %v118
  %v123 = vcombine.low %v119, %v119
  %124 = vrot.lane.b32.xlu0 %v122, 112
  %v125 = vpop.permute.xlu0 %124
  %126 = vrot.lane.b32.xlu0 %v118, 112
  %v127 = vpop.permute.xlu0 %126
  %128 = vrot.lane.b32.xlu0 %v123, 112
  %v129 = vpop.permute.xlu0 %128
  %vm130 = vcmask 916480
  %v131 = vsel %vm130, %v125, %v127
  %v132 = vsel %vm130, %v127, %v129
  %135 = vst [vmem:[#allocation3] sm:$0xf0] %v131
  %136 = vst [vmem:[#allocation3 + $0x8] sm:$0xf0] %v132
  %v137 = vld [vmem:[%s98] sm:$0xff]
  %v138 = vld [vmem:[%s98 + $0x8] sm:$0xf]
  %v141 = vcombine.low %v137, %v137
  %v142 = vcombine.low %v138, %v138
  %143 = vrot.lane.b32.xlu0 %v141, 112
  %v144 = vpop.permute.xlu0 %143
  %145 = vrot.lane.b32.xlu0 %v137, 112
  %v146 = vpop.permute.xlu0 %145
  %147 = vrot.lane.b32.xlu0 %v142, 112
  %v148 = vpop.permute.xlu0 %147
  %v149 = vsel %vm130, %v144, %v146
  %v150 = vsel %vm130, %v146, %v148
  %153 = vst [vmem:[#allocation3 + $0x10] sm:$0xf0] %v149
  %154 = vst [vmem:[#allocation3 + $0x18] sm:$0xf0] %v150
  %v155 = vld [vmem:[#allocation2] sm:$0xff]
  %v156 = vld [vmem:[#allocation2 + $0x8] sm:$0xf]
  %v159 = vcombine.high %v155, %v155
  %160 = vrot.lane.b32.xlu0 %v155, 111
  %v161 = vpop.permute.xlu0 %160
  %162 = vrot.lane.b32.xlu0 %v159, 111
  %v163 = vpop.permute.xlu0 %162
  %164 = vrot.lane.b32.xlu0 %v156, 111
  %v165 = vpop.permute.xlu0 %164
  %vm166 = vcmask 908288
  %v167 = vsel %vm166, %v161, %v163
  %v168 = vsel %vm166, %v163, %v165
  %v171 = vsel %vm76, %v167, 0.0
  %v172 = vsel %vm77, %v168, 0.0
  %173 = vst [vmem:[#allocation3 + $0x20] sm:$0xf] %v171
  %174 = vst [vmem:[#allocation3 + $0x28] sm:$0xf] %v172
  %v175 = vld [vmem:[%s98] sm:$0xff]
  %v176 = vld [vmem:[%s98 + $0x8] sm:$0xf]
  %v179 = vcombine.high %v175, %v175
  %180 = vrot.lane.b32.xlu0 %v175, 111
  %v181 = vpop.permute.xlu0 %180
  %182 = vrot.lane.b32.xlu0 %v179, 111
  %v183 = vpop.permute.xlu0 %182
  %184 = vrot.lane.b32.xlu0 %v176, 111
  %v185 = vpop.permute.xlu0 %184
  %v186 = vsel %vm166, %v181, %v183
  %v187 = vsel %vm166, %v183, %v185
  %v190 = vsel %vm76, %v186, 0.0
  %v191 = vsel %vm77, %v187, 0.0
  %192 = vst [vmem:[#allocation3 + $0x30] sm:$0xf] %v190
  %193 = vst [vmem:[#allocation3 + $0x38] sm:$0xf] %v191
  %v194 = vld [vmem:[#allocation2] sm:$0xff]
  %v195 = vld [vmem:[#allocation2 + $0x8] sm:$0xf]
  %v198 = vcombine.high %v194, %v194
  %199 = vrot.lane.b32.xlu0 %v194, 97
  %v200 = vpop.permute.xlu0 %199
  %201 = vrot.lane.b32.xlu0 %v198, 97
  %v202 = vpop.permute.xlu0 %201
  %203 = vrot.lane.b32.xlu0 %v195, 97
  %v204 = vpop.permute.xlu0 %203
  %vm205 = vcmask 793600
  %v206 = vsel %vm205, %v200, %v202
  %v207 = vsel %vm205, %v202, %v204
  %v210 = vsel %vm74, %v206, 0.0
  %v211 = vsel %vm75, %v207, 0.0
  %v214 = vrot.slane %v210, 4
  %v215 = vrot.slane %v211, 4
  %218 = vst [vmem:[#allocation3 + $0x20] sm:$0xf0] %v214
  %219 = vst [vmem:[#allocation3 + $0x28] sm:$0xf0] %v215
  %v220 = vld [vmem:[%s98] sm:$0xff]
  %v221 = vld [vmem:[%s98 + $0x8] sm:$0xf]
  %v224 = vcombine.high %v220, %v220
  %225 = vrot.lane.b32.xlu0 %v220, 97
  %v226 = vpop.permute.xlu0 %225
  %227 = vrot.lane.b32.xlu0 %v224, 97
  %v228 = vpop.permute.xlu0 %227
  %229 = vrot.lane.b32.xlu0 %v221, 97
  %v230 = vpop.permute.xlu0 %229
  %v231 = vsel %vm205, %v226, %v228
  %v232 = vsel %vm205, %v228, %v230
  %v235 = vsel %vm74, %v231, 0.0
  %v236 = vsel %vm75, %v232, 0.0
  %v239 = vrot.slane %v235, 4
  %v240 = vrot.slane %v236, 4
  %243 = vst [vmem:[#allocation3 + $0x30] sm:$0xf0] %v239
  %244 = vst [vmem:[#allocation3 + $0x38] sm:$0xf0] %v240
  %v245 = vld [vmem:[#allocation2] sm:$0xff]
  %v246 = vld [vmem:[#allocation2 + $0x8] sm:$0xf]
  %v249 = vcombine.high %v245, %v245
  %250 = vrot.lane.b32.xlu0 %v245, 96
  %v251 = vpop.permute.xlu0 %250
  %252 = vrot.lane.b32.xlu0 %v249, 96
  %v253 = vpop.permute.xlu0 %252
  %254 = vrot.lane.b32.xlu0 %v246, 96
  %v255 = vpop.permute.xlu0 %254
  %vm256 = vcmask 785408
  %v257 = vsel %vm256, %v251, %v253
  %v258 = vsel %vm256, %v253, %v255
  %261 = vst [vmem:[#allocation3 + $0x40] sm:$0xf] %v257
  %262 = vst [vmem:[#allocation3 + $0x48] sm:$0xf] %v258
  %v263 = vld [vmem:[%s98] sm:$0xff]
  %v264 = vld [vmem:[%s98 + $0x8] sm:$0xf]
  %v267 = vcombine.high %v263, %v263
  %268 = vrot.lane.b32.xlu0 %v263, 96
  %v269 = vpop.permute.xlu0 %268
  %270 = vrot.lane.b32.xlu0 %v267, 96
  %v271 = vpop.permute.xlu0 %270
  %272 = vrot.lane.b32.xlu0 %v264, 96
  %v273 = vpop.permute.xlu0 %272
  %v274 = vsel %vm256, %v269, %v271
  %v275 = vsel %vm256, %v271, %v273
  %278 = vst [vmem:[#allocation3 + $0x50] sm:$0xf] %v274
  %279 = vst [vmem:[#allocation3 + $0x58] sm:$0xf] %v275
  %v280 = vld [vmem:[#allocation2] sm:$0xff]
  %v281 = vld [vmem:[#allocation2 + $0x8] sm:$0xf]
  %v284 = vcombine.high %v280, %v280
  %285 = vrot.lane.b32.xlu0 %v280, 95
  %v286 = vpop.permute.xlu0 %285
  %287 = vrot.lane.b32.xlu0 %v284, 95
  %v288 = vpop.permute.xlu0 %287
  %289 = vrot.lane.b32.xlu0 %v281, 95
  %v290 = vpop.permute.xlu0 %289
  %vm291 = vcmask 777216
  %v292 = vsel %vm291, %v286, %v288
  %v293 = vsel %vm291, %v288, %v290
  %v296 = vsel %vm76, %v292, 0.0
  %v297 = vsel %vm77, %v293, 0.0
  %v300 = vrot.slane %v296, 4
  %v301 = vrot.slane %v297, 4
  %304 = vst [vmem:[#allocation3 + $0x40] sm:$0xf0] %v300
  %305 = vst [vmem:[#allocation3 + $0x48] sm:$0xf0] %v301
  %v306 = vld [vmem:[%s98] sm:$0xff]
  %v307 = vld [vmem:[%s98 + $0x8] sm:$0xf]
  %v310 = vcombine.high %v306, %v306
  %311 = vrot.lane.b32.xlu0 %v306, 95
  %v312 = vpop.permute.xlu0 %311
  %313 = vrot.lane.b32.xlu0 %v310, 95
  %v314 = vpop.permute.xlu0 %313
  %315 = vrot.lane.b32.xlu0 %v307, 95
  %v316 = vpop.permute.xlu0 %315
  %v317 = vsel %vm291, %v312, %v314
  %v318 = vsel %vm291, %v314, %v316
  %v321 = vsel %vm76, %v317, 0.0
  %v322 = vsel %vm77, %v318, 0.0
  %v325 = vrot.slane %v321, 4
  %v326 = vrot.slane %v322, 4
  %329 = vst [vmem:[#allocation3 + $0x50] sm:$0xf0] %v325
  %330 = vst [vmem:[#allocation3 + $0x58] sm:$0xf0] %v326
  %v331 = vld [vmem:[#allocation2] sm:$0xff]
  %v332 = vld [vmem:[#allocation2 + $0x8] sm:$0xf]
  %v335 = vcombine.high %v331, %v331
  %336 = vrot.lane.b32.xlu0 %v331, 81
  %v337 = vpop.permute.xlu0 %336
  %338 = vrot.lane.b32.xlu0 %v335, 81
  %v339 = vpop.permute.xlu0 %338
  %340 = vrot.lane.b32.xlu0 %v332, 81
  %v341 = vpop.permute.xlu0 %340
  %vm342 = vcmask 662528
  %v343 = vsel %vm342, %v337, %v339
  %v344 = vsel %vm342, %v339, %v341
  %v347 = vsel %vm74, %v343, 0.0
  %v348 = vsel %vm75, %v344, 0.0
  %349 = vst [vmem:[#allocation3 + $0x60] sm:$0xf] %v347
  %350 = vst [vmem:[#allocation3 + $0x68] sm:$0xf] %v348
  %v351 = vld [vmem:[%s98] sm:$0xff]
  %v352 = vld [vmem:[%s98 + $0x8] sm:$0xf]
  %v355 = vcombine.high %v351, %v351
  %356 = vrot.lane.b32.xlu0 %v351, 81
  %v357 = vpop.permute.xlu0 %356
  %358 = vrot.lane.b32.xlu0 %v355, 81
  %v359 = vpop.permute.xlu0 %358
  %360 = vrot.lane.b32.xlu0 %v352, 81
  %v361 = vpop.permute.xlu0 %360
  %v362 = vsel %vm342, %v357, %v359
  %v363 = vsel %vm342, %v359, %v361
  %v366 = vsel %vm74, %v362, 0.0
  %v367 = vsel %vm75, %v363, 0.0
  %368 = vst [vmem:[#allocation3 + $0x70] sm:$0xf] %v366
  %369 = vst [vmem:[#allocation3 + $0x78] sm:$0xf] %v367
  %v370 = vld [vmem:[#allocation2] sm:$0xff]
  %v371 = vld [vmem:[#allocation2 + $0x8] sm:$0xf]
  %v374 = vcombine.low %v370, %v370
  %v375 = vcombine.low %v371, %v371
  %376 = vrot.lane.b32.xlu0 %v374, 80
  %v377 = vpop.permute.xlu0 %376
  %378 = vrot.lane.b32.xlu0 %v370, 80
  %v379 = vpop.permute.xlu0 %378
  %380 = vrot.lane.b32.xlu0 %v375, 80
  %v381 = vpop.permute.xlu0 %380
  %vm382 = vcmask 654336
  %v383 = vsel %vm382, %v377, %v379
  %v384 = vsel %vm382, %v379, %v381
  %387 = vst [vmem:[#allocation3 + $0x60] sm:$0xf0] %v383
  %388 = vst [vmem:[#allocation3 + $0x68] sm:$0xf0] %v384
  %v389 = vld [vmem:[%s98] sm:$0xff]
  %v390 = vld [vmem:[%s98 + $0x8] sm:$0xf]
  %v393 = vcombine.low %v389, %v389
  %v394 = vcombine.low %v390, %v390
  %395 = vrot.lane.b32.xlu0 %v393, 80
  %v396 = vpop.permute.xlu0 %395
  %397 = vrot.lane.b32.xlu0 %v389, 80
  %v398 = vpop.permute.xlu0 %397
  %399 = vrot.lane.b32.xlu0 %v394, 80
  %v400 = vpop.permute.xlu0 %399
  %v401 = vsel %vm382, %v396, %v398
  %v402 = vsel %vm382, %v398, %v400
  %405 = vst [vmem:[#allocation3 + $0x70] sm:$0xf0] %v401
  %406 = vst [vmem:[#allocation3 + $0x78] sm:$0xf0] %v402
  %v407 = vld [vmem:[#allocation2] sm:$0xff]
  %v408 = vld [vmem:[#allocation2 + $0x8] sm:$0xf]
  %v411 = vcombine.high %v407, %v407
  %412 = vrot.lane.b32.xlu0 %v407, 79
  %v413 = vpop.permute.xlu0 %412
  %414 = vrot.lane.b32.xlu0 %v411, 79
  %v415 = vpop.permute.xlu0 %414
  %416 = vrot.lane.b32.xlu0 %v408, 79
  %v417 = vpop.permute.xlu0 %416
  %vm418 = vcmask 646144
  %v419 = vsel %vm418, %v413, %v415
  %v420 = vsel %vm418, %v415, %v417
  %v423 = vsel %vm76, %v419, 0.0
  %v424 = vsel %vm77, %v420, 0.0
  %425 = vst [vmem:[#allocation3 + $0x80] sm:$0xf] %v423
  %426 = vst [vmem:[#allocation3 + $0x88] sm:$0xf] %v424
  %v427 = vld [vmem:[%s98] sm:$0xff]
  %v428 = vld [vmem:[%s98 + $0x8] sm:$0xf]
  %v431 = vcombine.high %v427, %v427
  %432 = vrot.lane.b32.xlu0 %v427, 79
  %v433 = vpop.permute.xlu0 %432
  %434 = vrot.lane.b32.xlu0 %v431, 79
  %v435 = vpop.permute.xlu0 %434
  %436 = vrot.lane.b32.xlu0 %v428, 79
  %v437 = vpop.permute.xlu0 %436
  %v438 = vsel %vm418, %v433, %v435
  %v439 = vsel %vm418, %v435, %v437
  %v442 = vsel %vm76, %v438, 0.0
  %v443 = vsel %vm77, %v439, 0.0
  %444 = vst [vmem:[#allocation3 + $0x90] sm:$0xf] %v442
  %445 = vst [vmem:[#allocation3 + $0x98] sm:$0xf] %v443
  %v446 = vld [vmem:[%s1] sm:$0xff]
  %v447 = vld [vmem:[#allocation3] sm:$0xff]
  %v448 = vld [vmem:[#allocation3 + $0x8] sm:$0xff]
  %v449 = vld [vmem:[#allocation3 + $0x10] sm:$0xff]
  %v450 = vld [vmem:[#allocation3 + $0x18] sm:$0xff]
  %v451 = vld [vmem:[#allocation3 + $0x20] sm:$0xff]
  %v452 = vld [vmem:[#allocation3 + $0x28] sm:$0xff]
  %v453 = vld [vmem:[#allocation3 + $0x30] sm:$0xff]
  %v454 = vld [vmem:[#allocation3 + $0x38] sm:$0xff]
  %v455 = vld [vmem:[#allocation3 + $0x40] sm:$0xff]
  %v456 = vld [vmem:[#allocation3 + $0x48] sm:$0xff]
  %v457 = vld [vmem:[#allocation3 + $0x50] sm:$0xff]
  %v458 = vld [vmem:[#allocation3 + $0x58] sm:$0xff]
  %v459 = vld [vmem:[#allocation3 + $0x60] sm:$0xff]
  %v460 = vld [vmem:[#allocation3 + $0x68] sm:$0xff]
  %v461 = vld [vmem:[#allocation3 + $0x70] sm:$0xff]
  %v462 = vld [vmem:[#allocation3 + $0x78] sm:$0xff]
  %v463 = vld [vmem:[#allocation3 + $0x80] sm:$0xf]
  %v464 = vld [vmem:[#allocation3 + $0x88] sm:$0xf]
  %v465 = vld [vmem:[#allocation3 + $0x90] sm:$0xf]
  %v466 = vld [vmem:[#allocation3 + $0x98] sm:$0xf]
  %vm467 = vcmask 293888
  %v469 = vsel %vm467, %v446, 0
  %vm471 = vcmask 1043456
  %v473 = vsel %vm471, %v463, 0
  %v476 = vsel %vm471, %v464, 0
  %v479 = vsel %vm471, %v465, 0
  %v482 = vsel %vm471, %v466, 0
  %484 = vmatprep.subr.mxu0 %v448
  %485 = vmatpush1.msra.mxu0 %v447
  %486 = vmatprep.subr.mxu0 %v452
  %487 = vmatpush1.msra.mxu0 %v451
  %488 = vmatprep.subr.mxu0 %v456
  %489 = vmatpush1.msra.mxu0 %v455
  %490 = vmatprep.subr.mxu0 %v460
  %491 = vmatpush1.msra.mxu0 %v459
  %492 = vmatprep.subr.mxu0 %v476
  %493 = vmatpush1.msra.mxu0 %v473
  %494 = vmatprep.subr.mxu0 0.0
  %495 = vmatpush1.msra.mxu0 0.0
  %496 = vmatprep.subr.mxu0 0.0
  %497 = vmatpush1.msra.mxu0 0.0
  %498 = vmatprep.subr.mxu0 0.0
  %499 = vmatpush1.msra.mxu0 0.0
  %500 = vmatprep.subr.mxu0 0.0
  %501 = vmatpush1.msra.mxu0 0.0
  %502 = vmatprep.subr.mxu0 0.0
  %503 = vmatpush1.msra.mxu0 0.0
  %504 = vmatprep.subr.mxu0 0.0
  %505 = vmatpush1.msra.mxu0 0.0
  %506 = vmatprep.subr.mxu0 0.0
  %507 = vmatpush1.msra.mxu0 0.0
  %508 = vmatprep.subr.mxu0 0.0
  %509 = vmatpush1.msra.mxu0 0.0
  %510 = vmatprep.subr.mxu0 0.0
  %511 = vmatpush1.msra.mxu0 0.0
  %512 = vmatprep.subr.mxu0 0.0
  %513 = vmatpush1.msra.mxu0 0.0
  %514 = vmatprep.subr.mxu0 0.0
  %515 = vmatpush1.msra.mxu0 0.0
  %516 = vmatprep.subr.mxu0 0.0
  %517 = vmatpush1.msra.mxu0 0.0
  %518 = vmatprep.subr.mxu0 0.0
  %519 = vmatpush1.msra.mxu0 0.0
  %520 = vmatprep.subr.mxu0 0.0
  %521 = vmatpush1.msra.mxu0 0.0
  %522 = vmatprep.subr.mxu0 0.0
  %523 = vmatpush1.msra.mxu0 0.0
  %524 = vmatprep.subr.mxu0 0.0
  %525 = vmatpush1.msra.mxu0 0.0
  %526 = vmatprep.subr.mxu0 0.0
  %527 = vmatpush1.msra.mxu0 0.0
  %528 = vmatprep.subr.mxu0 0.0
  %529 = vmatpush1.msra.mxu0 0.0
  %530 = vmatprep.subr.mxu0 0.0
  %531 = vmatpush1.msra.mxu0 0.0
  %532 = vmatprep.subr.mxu0 0.0
  %533 = vmatpush1.msra.mxu0 0.0
  %534 = vmatprep.subr.mxu0 0.0
  %535 = vmatpush1.msra.mxu0 0.0
  %536 = vmatprep.subr.mxu0 0.0
  %537 = vmatpush1.msra.mxu0 0.0
  %538 = vmatprep.subr.mxu0 0.0
  %539 = vmatpush1.msra.mxu0 0.0
  %540 = vmatprep.subr.mxu0 0.0
  %541 = vmatpush1.msra.mxu0 0.0
  %542 = vmatprep.subr.mxu0 0.0
  %543 = vmatpush1.msra.mxu0 0.0
  %544 = vmatprep.subr.mxu0 0.0
  %545 = vmatpush1.msra.mxu0 0.0
  %546 = vmatprep.subr.mxu0 0.0
  %547 = vmatpush1.msra.mxu0 0.0
  %548 = vmatprep.mubr.f32.mxu0 0.0
  %549 = vmatmul.mubr.f32.gmra.mrb[0].mxu0 %v469
  %v550 = vpop.f32.mrb[0].mxu0
  %v551 = vadd.f32 0.0, %v550
  %v552 = vpop.f32.mrb[0].mxu0
  %v553 = vadd.f32 0.0, %v552
  %554 = vdwg.mxu0
  %555 = vmatprep.subr.mxu0 %v450
  %556 = vmatpush1.msra.mxu0 %v449
  %557 = vmatprep.subr.mxu0 %v454
  %558 = vmatpush1.msra.mxu0 %v453
  %559 = vmatprep.subr.mxu0 %v458
  %560 = vmatpush1.msra.mxu0 %v457
  %561 = vmatprep.subr.mxu0 %v462
  %562 = vmatpush1.msra.mxu0 %v461
  %563 = vmatprep.subr.mxu0 %v482
  %564 = vmatpush1.msra.mxu0 %v479
  %565 = vmatprep.subr.mxu0 0.0
  %566 = vmatpush1.msra.mxu0 0.0
  %567 = vmatprep.subr.mxu0 0.0
  %568 = vmatpush1.msra.mxu0 0.0
  %569 = vmatprep.subr.mxu0 0.0
  %570 = vmatpush1.msra.mxu0 0.0
  %571 = vmatprep.subr.mxu0 0.0
  %572 = vmatpush1.msra.mxu0 0.0
  %573 = vmatprep.subr.mxu0 0.0
  %574 = vmatpush1.msra.mxu0 0.0
  %575 = vmatprep.subr.mxu0 0.0
  %576 = vmatpush1.msra.mxu0 0.0
  %577 = vmatprep.subr.mxu0 0.0
  %578 = vmatpush1.msra.mxu0 0.0
  %579 = vmatprep.subr.mxu0 0.0
  %580 = vmatpush1.msra.mxu0 0.0
  %581 = vmatprep.subr.mxu0 0.0
  %582 = vmatpush1.msra.mxu0 0.0
  %583 = vmatprep.subr.mxu0 0.0
  %584 = vmatpush1.msra.mxu0 0.0
  %585 = vmatprep.subr.mxu0 0.0
  %586 = vmatpush1.msra.mxu0 0.0
  %587 = vmatprep.subr.mxu0 0.0
  %588 = vmatpush1.msra.mxu0 0.0
  %589 = vmatprep.subr.mxu0 0.0
  %590 = vmatpush1.msra.mxu0 0.0
  %591 = vmatprep.subr.mxu0 0.0
  %592 = vmatpush1.msra.mxu0 0.0
  %593 = vmatprep.subr.mxu0 0.0
  %594 = vmatpush1.msra.mxu0 0.0
  %595 = vmatprep.subr.mxu0 0.0
  %596 = vmatpush1.msra.mxu0 0.0
  %597 = vmatprep.subr.mxu0 0.0
  %598 = vmatpush1.msra.mxu0 0.0
  %599 = vmatprep.subr.mxu0 0.0
  %600 = vmatpush1.msra.mxu0 0.0
  %601 = vmatprep.subr.mxu0 0.0
  %602 = vmatpush1.msra.mxu0 0.0
  %603 = vmatprep.subr.mxu0 0.0
  %604 = vmatpush1.msra.mxu0 0.0
  %605 = vmatprep.subr.mxu0 0.0
  %606 = vmatpush1.msra.mxu0 0.0
  %607 = vmatprep.subr.mxu0 0.0
  %608 = vmatpush1.msra.mxu0 0.0
  %609 = vmatprep.subr.mxu0 0.0
  %610 = vmatpush1.msra.mxu0 0.0
  %611 = vmatprep.subr.mxu0 0.0
  %612 = vmatpush1.msra.mxu0 0.0
  %613 = vmatprep.subr.mxu0 0.0
  %614 = vmatpush1.msra.mxu0 0.0
  %615 = vmatprep.subr.mxu0 0.0
  %616 = vmatpush1.msra.mxu0 0.0
  %617 = vmatprep.subr.mxu0 0.0
  %618 = vmatpush1.msra.mxu0 0.0
  %619 = vmatprep.mubr.f32.mxu0 0.0
  %620 = vmatmul.mubr.f32.gmra.mrb[0].mxu0 %v469
  %v621 = vpop.f32.mrb[0].mxu0
  %v622 = vadd.f32 0.0, %v621
  %v623 = vpop.f32.mrb[0].mxu0
  %v624 = vadd.f32 0.0, %v623
  %625 = vdwg.mxu0
  %v626 = vadd.f32 %v551, %v553
  %v627 = vadd.f32 %v626, %v622
  %v628 = vadd.f32 %v627, %v624
  %629 = vadd.xlane.f32.xlu0 %v628
  %v630 = vpop.xlane.xlu0 %629
  %v631 = vmul.f32 %v551, %v551
  %v632 = vmul.f32 %v553, %v553
  %v633 = vmul.f32 %v622, %v622
  %v634 = vmul.f32 %v624, %v624
  %v635 = vadd.f32 %v631, %v632
  %v636 = vadd.f32 %v635, %v633
  %v637 = vadd.f32 %v636, %v634
  %638 = vadd.xlane.f32.xlu0 %v637
  %v639 = vpop.xlane.xlu0 %638
  %v640 = vmul.f32 %v630, 0.001953125
  %v641 = vmul.f32 %v639, 0.001953125
  %v642 = vmul.f32 %v640, %v640
  %v643 = vsub.f32 %v641, %v642
  %v644 = vld [vmem:[%s2] sm:$0xff]
  %v645 = vadd.f32 %v643, 1e-05
  %v646 = vrsqrt.pop %v645
  %v647 = vmul.f32 %v644, %v646
  %v648 = vld [vmem:[%s3] sm:$0xff]
  %v649 = vmul.f32 %v640, %v647
  %v650 = vsub.f32 %v648, %v649
  %652 = vset.pattern.permute.xlu0 0
  %653 = vperm.xlu0 %652, %v647
  %v654 = vpop.permute.xlu0 %653
  %v656 = vmul.f32 %v551, %v654
  %v657 = vmul.f32 %v553, %v654
  %v658 = vmul.f32 %v622, %v654
  %v659 = vmul.f32 %v624, %v654
  %661 = vset.pattern.permute.xlu0 0
  %662 = vperm.xlu0 %661, %v650
  %v663 = vpop.permute.xlu0 %662
  %v665 = vadd.f32 %v656, %v663
  %v666 = vadd.f32 %v657, %v663
  %v667 = vadd.f32 %v658, %v663
  %v668 = vadd.f32 %v659, %v663
  %v669 = vmax.f32 %v665, 0.0
  %v670 = vmax.f32 %v666, 0.0
  %v671 = vmax.f32 %v667, 0.0
  %v672 = vmax.f32 %v668, 0.0
  %673 = vst [vmem:[%s4] sm:$0xff] %v669
  %674 = vst [vmem:[%s4 + $0x8] sm:$0xff] %v670
  %s675 = scalar_lea.vmem %s4, 16
  %676 = vst [vmem:[%s675] sm:$0xff] %v671
  %677 = vst [vmem:[%s675 + $0x8] sm:$0xff] %v672
  // Predicated region
  $region18: #{convnext_conv.1} parent=0 // pred_check
    _
  $region19: #{convnext_conv.1} parent=0 // pred_check_branch
    %679 = sbr.rel (0) target = $region21
  $region20: #{convnext_conv.1} parent=0 // pred_region
    _
  $region21: #{convnext_conv.1} parent=0 // pred_fallthru
    _
  // Predicated region
  $region22: #{convnext_conv.1} parent=0 // pred_check
    _
  $region23: #{convnext_conv.1} parent=0 // pred_check_branch
    %681 = sbr.rel (0) target = $region25
  $region24: #{convnext_conv.1} parent=0 // pred_region
    _
  $region25: #{convnext_conv.1} parent=0 // pred_fallthru
    _

</llo_original>
